<compile_context>
chip_gen: v6e
topology: v6e:2x2x1
jax: 0.10.0
libtpu: 0.0.40
codegen_flags: <defaults>
</compile_context>

<pallas_src>
import math
import functools

import jax
import jax.numpy as jnp
from jax.experimental import pallas as pl
from jax.experimental.pallas import tpu as pltpu


def _to_2tuple(v):
    return tuple(v) if isinstance(v, (tuple, list)) else (v, v)


_TARGET_BLOCK_BYTES = 2 * 1024 * 1024   # aim for ~1-4 MiB per-buffer blocks


# ----------------------------------------------------------------------------
# Hardware-aware sizing helpers
# ----------------------------------------------------------------------------
@functools.lru_cache(maxsize=None)
def _vmem_budget_and_limit():
    """(block budget, vmem_limit_bytes) chosen per TPU generation."""
    cap = None
    try:
        info = pltpu.get_tpu_info()
        for name in ("vmem_capacity_bytes", "vmem_bytes", "vmem_size_bytes"):
            v = getattr(info, name, None)
            if v:
                cap = int(v)
                break
    except Exception:
        cap = None
    if cap is None:
        # Conservative defaults safe on every generation.
        return 12 << 20, 32 << 20
    if cap >= (96 << 20):          # v5e / v6e: 128 MiB physical VMEM
        budget, limit = 40 << 20, 64 << 20
    else:                          # v7x-class: 64 MiB physical VMEM
        budget, limit = 16 << 20, 40 << 20
    limit = min(limit, cap - (8 << 20))
    budget = min(budget, limit - (4 << 20))
    return budget, limit


def _sublane_quantum(dtype):
    """Sublane packing quantum: 8 for f32, 16 for bf16/f16, 32 for int8/fp8."""
    itemsize = jnp.dtype(dtype).itemsize
    return max(8, 32 // max(1, itemsize))


def _padded_plane_bytes(shape2d, dtype):
    """VMEM bytes of one (rows, cols) plane laid out in (quantum, 128) tiles."""
    rows, cols = shape2d
    q = _sublane_quantum(dtype)
    itemsize = jnp.dtype(dtype).itemsize
    rows_p = -(-rows // q) * q
    cols_p = -(-cols // 128) * 128
    return rows_p * cols_p * itemsize


def _lane_padded_bytes(n_elems, dtype):
    """Bytes of one lane-dim row of n_elems, rounded up to 128 lanes."""
    return (-(-n_elems // 128) * 128) * jnp.dtype(dtype).itemsize


def _choose_p_tile(p, per_plane_bytes, quantum, budget):
    """Pick the plane-tile size.

    Hard constraints: p_tile * per_plane_bytes <= budget (per_plane_bytes is
    the padded, double-buffered in+out footprint of ONE plane) and, when
    quantum > 1 (2-D flattened blocks), p_tile is a multiple of the sublane
    quantum or spans the full axis.
    Preferences: ~1-4 MiB per-step blocks and >= 2-4 grid steps on non-tiny
    workloads so both DMA directions stay busy and both v7x TensorCores get
    grid steps. Returns None when nothing valid fits the budget.
    """
    max_fit = int(budget // per_plane_bytes)
    if max_fit < 1:
        return None
    total = p * per_plane_bytes
    tile = max(1, min(max_fit, _TARGET_BLOCK_BYTES // per_plane_bytes, p))
    if total > 4 * _TARGET_BLOCK_BYTES:
        tile = min(tile, max(1, p // 4))      # >= 4 grid steps
    elif total > _TARGET_BLOCK_BYTES:
        tile = min(tile, max(1, p // 2))      # >= 2 grid steps
    if quantum > 1 and tile < p:
        if tile >= quantum:
            tile = (tile // quantum) * quantum
        elif quantum <= min(p, max_fit):
            tile = quantum
        elif p <= max_fit:
            tile = p                           # full-extent dim is always legal
        else:
            return None
    return int(min(tile, p))


# ----------------------------------------------------------------------------
# Module
# ----------------------------------------------------------------------------
class AdaptivePaddingPallas:
    """JAX/Pallas port of AdaptivePadding. Input x: (N, C, H, W)."""

    def __init__(self, kernel_size=1, stride=1, dilation=1, padding="corner"):
        assert padding in ("same", "corner")
        self.kernel_size = _to_2tuple(kernel_size)
        self.stride = _to_2tuple(stride)
        self.dilation = _to_2tuple(dilation)
        self.padding = padding

    def get_pad_shape(self, input_shape):
        input_h, input_w = input_shape
        kernel_h, kernel_w = self.kernel_size
        stride_h, stride_w = self.stride
        output_h = math.ceil(input_h / stride_h)
        output_w = math.ceil(input_w / stride_w)
        pad_h = max(
            (output_h - 1) * stride_h + (kernel_h - 1) * self.dilation[0] + 1 - input_h, 0
        )
        pad_w = max(
            (output_w - 1) * stride_w + (kernel_w - 1) * self.dilation[1] + 1 - input_w, 0
        )
        return pad_h, pad_w

    def __call__(self, x):
        n, c, h, w = x.shape
        pad_h, pad_w = self.get_pad_shape((h, w))
        if pad_h == 0 and pad_w == 0:
            return x
        if self.padding == "corner":
            pad_top, pad_left = 0, 0
        else:  # "same"
            pad_top, pad_left = pad_h // 2, pad_w // 2
        h_out, w_out = h + pad_h, w + pad_w
        return _adaptive_pad(x, h_out, w_out, pad_top, pad_left)


# ----------------------------------------------------------------------------
# Kernels
# ----------------------------------------------------------------------------
def _pad_kernel_planes(x_ref, o_ref, *, pad_top, pad_left, h, w, h_out, w_out):
    """General 2-D padding. x_ref: (PT, H, W); o_ref: (PT, H_out, W_out).
    Interior rows are written with ONE lane-dense full-width store; only the
    top/bottom strips get separate (full-width) zero stores."""
    pt = o_ref.shape[0]
    dt = o_ref.dtype
    pad_bottom = h_out - pad_top - h
    pad_right = w_out - pad_left - w
    xin = x_ref[...]
    parts = []
    if pad_left > 0:
        parts.append(jnp.zeros((pt, h, pad_left), dt))
    parts.append(xin)
    if pad_right > 0:
        parts.append(jnp.zeros((pt, h, pad_right), dt))
    slab = jnp.concatenate(parts, axis=-1) if len(parts) > 1 else parts[0]
    o_ref[:, pad_top:pad_top + h, :] = slab
    if pad_top > 0:
        o_ref[:, 0:pad_top, :] = jnp.zeros((pt, pad_top, w_out), dt)
    if pad_bottom > 0:
        o_ref[:, pad_top + h:, :] = jnp.zeros((pt, pad_bottom, w_out), dt)


def _pad_kernel_planes_htiled(x_ref, o_ref, *, th, h, w, w_out):
    """Corner-mode padding with H tiled over a second grid axis.
    x_ref: (1, TH, W); o_ref: (1, TH, W_out). Rows that fall in the bottom
    pad (or in the ragged garbage tail of the last input block) are zeroed
    via a mask; the store stays a single lane-dense full block."""
    j = pl.program_id(1)
    pt = o_ref.shape[0]
    dt = o_ref.dtype
    pad_right = w_out - w
    xin = x_ref[...]
    if pad_right > 0:
        slab = jnp.concatenate([xin, jnp.zeros((pt, th, pad_right), dt)], axis=-1)
    else:
        slab = xin
    row = j * th + jax.lax.broadcasted_iota(jnp.int32, (pt, th, w_out), 1)
    o_ref[...] = jnp.where(row < h, slab, jnp.zeros_like(slab))


def _pad_kernel_rows_flat(x_ref, o_ref, *, top_elems, interior_elems):
    """Row-only padding with H,W flattened (lane-dense stores; top_elems is a
    multiple of 128 so the interior store start is lane-aligned).
    x_ref: (PT, H*W); o_ref: (PT, H_out*W)."""
    pt = o_ref.shape[0]
    total = o_ref.shape[1]
    if top_elems > 0:
        o_ref[:, 0:top_elems] = jnp.zeros((pt, top_elems), o_ref.dtype)
    o_ref[:, top_elems:top_elems + interior_elems] = x_ref[...]
    tail = total - top_elems - interior_elems
    if tail > 0:
        o_ref[:, top_elems + interior_elems:] = jnp.zeros((pt, tail), o_ref.dtype)


# ----------------------------------------------------------------------------
# pallas_call wrappers
# ----------------------------------------------------------------------------
def _pad_rows_pallas(x, p, h, w, h_out, pad_top, budget, limit):
    """Lane-dense flattened path for pad_w == 0 and 128-aligned interior start."""
    dtype = x.dtype
    q = _sublane_quantum(dtype)
    in_l, out_l = h * w, h_out * w
    # Padded, double-buffered (in + out) per-plane VMEM footprint.
    per_plane = 2 * (_lane_padded_bytes(in_l, dtype) + _lane_padded_bytes(out_l, dtype))
    p_tile = _choose_p_tile(p, per_plane, quantum=q, budget=budget)
    if p_tile is None:
        return None  # fall back to the plane path

    x2 = x.reshape(p, in_l)
    kernel = functools.partial(
        _pad_kernel_rows_flat, top_elems=pad_top * w, interior_elems=in_l
    )
    return pl.pallas_call(
        kernel,
        out_shape=jax.ShapeDtypeStruct((p, out_l), dtype),
        grid_spec=pltpu.PrefetchScalarGridSpec(
            num_scalar_prefetch=0,
            grid=(pl.cdiv(p, p_tile),),
            in_specs=[pl.BlockSpec((p_tile, in_l), lambda i: (i, 0))],
            out_specs=pl.BlockSpec((p_tile, out_l), lambda i: (i, 0)),
        ),
        compiler_params=pltpu.CompilerParams(
            dimension_semantics=("parallel",),
            vmem_limit_bytes=limit,
        ),
    )(x2)


def _pad_planes_htiled_pallas(x3, p, h, w, h_out, w_out, budget, limit, force_th=None):
    """Corner-mode plane path with a second grid axis over H blocks (used when
    a single plane does not fit the VMEM block budget)."""
    dtype = x3.dtype
    q = _sublane_quantum(dtype)
    per_row = 2 * (_lane_padded_bytes(w, dtype) + _lane_padded_bytes(w_out, dtype))
    if force_th is not None:
        th = force_th
    else:
        th_fit = int(budget // per_row)
        if th_fit < q:
            # TODO(synk): add W-tiling for planes whose single padded row pair
            # exceeds the budget; raise the limit as a stopgap.
            th = q
            limit = max(limit, q * per_row + (4 << 20))
        else:
            th_target = max(q, _TARGET_BLOCK_BYTES // per_row)
            th = max(q, (min(th_fit, th_target) // q) * q)

    n_in_blocks = pl.cdiv(h, th)
    max_in_block = n_in_blocks - 1

    kernel = functools.partial(_pad_kernel_planes_htiled, th=th, h=h, w=w, w_out=w_out)
    return pl.pallas_call(
        kernel,
        out_shape=jax.ShapeDtypeStruct((p, h_out, w_out), dtype),
        grid_spec=pltpu.PrefetchScalarGridSpec(
            num_scalar_prefetch=0,
            grid=(p, pl.cdiv(h_out, th)),
            in_specs=[pl.BlockSpec(
                (1, th, w), lambda i, j: (i, jnp.minimum(j, max_in_block), 0))],
            out_specs=pl.BlockSpec((1, th, w_out), lambda i, j: (i, j, 0)),
        ),
        compiler_params=pltpu.CompilerParams(
            dimension_semantics=("parallel", "parallel"),
            vmem_limit_bytes=limit,
        ),
    )(x3)


def _pad_planes_pallas(x, p, h, w, h_out, w_out, pad_top, pad_left, budget, limit):
    """Generic path: blocks of many (H, W) planes; H-tiled fallback for huge
    corner-mode planes."""
    dtype = x.dtype
    per_plane = 2 * (_padded_plane_bytes((h, w), dtype)
                     + _padded_plane_bytes((h_out, w_out), dtype))
    p_tile = _choose_p_tile(p, per_plane, quantum=1, budget=budget)
    x3 = x.reshape(p, h, w)

    if p_tile is None:
        if pad_top == 0 and pad_left == 0:
            return _pad_planes_htiled_pallas(x3, p, h, w, h_out, w_out, budget, limit)
        # TODO(synk): H-tile the "same"-mode path too (pad_top misaligns input
        # vs output H blocks); fall back to one plane per block with a raised
        # VMEM limit so huge planes still compile.
        p_tile = 1
        limit = max(limit, per_plane + (4 << 20))

    kernel = functools.partial(
        _pad_kernel_planes,
        pad_top=pad_top, pad_left=pad_left, h=h, w=w, h_out=h_out, w_out=w_out,
    )
    return pl.pallas_call(
        kernel,
        out_shape=jax.ShapeDtypeStruct((p, h_out, w_out), dtype),
        grid_spec=pltpu.PrefetchScalarGridSpec(
            num_scalar_prefetch=0,
            grid=(pl.cdiv(p, p_tile),),
            in_specs=[pl.BlockSpec((p_tile, h, w), lambda i: (i, 0, 0))],
            out_specs=pl.BlockSpec((p_tile, h_out, w_out), lambda i: (i, 0, 0)),
        ),
        compiler_params=pltpu.CompilerParams(
            dimension_semantics=("parallel",),
            vmem_limit_bytes=limit,
        ),
    )(x3)


@functools.partial(jax.jit, static_argnums=(1, 2, 3, 4))
def _adaptive_pad(x, h_out, w_out, pad_top, pad_left):
    n, c, h, w = x.shape
    p = n * c
    budget, limit = _vmem_budget_and_limit()
    # Flattened lane-dense path only when pad_w == 0 AND the interior store
    # start is 128-lane aligned (always true in "corner" mode).
    if w_out == w and pad_left == 0 and (pad_top * w) % 128 == 0:
        out = _pad_rows_pallas(x, p, h, w, h_out, pad_top, budget, limit)
        if out is not None:
            return out.reshape(n, c, h_out, w_out)
    out = _pad_planes_pallas(x, p, h, w, h_out, w_out, pad_top, pad_left, budget, limit)
    return out.reshape(n, c, h_out, w_out)


# ----------------------------------------------------------------------------
# Reference + self-test
# ----------------------------------------------------------------------------
def _reference_pad(x, module: AdaptivePaddingPallas):
    n, c, h, w = x.shape
    pad_h, pad_w = module.get_pad_shape((h, w))
    if pad_h == 0 and pad_w == 0:
        return x
    if module.padding == "corner":
        cfg = ((0, 0), (0, 0), (0, pad_h), (0, pad_w))
    else:
        cfg = ((0, 0), (0, 0),
               (pad_h // 2, pad_h - pad_h // 2),
               (pad_w // 2, pad_w - pad_w // 2))
    return jnp.pad(x, cfg)


if __name__ == "__main__":
    key = jax.random.PRNGKey(0)
    ok = True

    # Case 1: generic 2-D padding (docstring example, batched with channels):
    # kernel_size=16, stride=16, input (2, 4, 15, 17) -> output (2, 4, 16, 32)
    x = jax.random.normal(key, (2, 4, 15, 17), dtype=jnp.float32)
    for mode in ("corner", "same"):
        mod = AdaptivePaddingPallas(kernel_size=16, stride=16, dilation=1, padding=mode)
        out = jax.block_until_ready(mod(x))
        ref = _reference_pad(x, mod)
        if out.shape != (2, 4, 16, 32) or not jnp.allclose(out, ref):
            ok = False

    # Case 1b: bf16 input (exercises dtype-aware sublane quantum / footprint).
    x_bf16 = x.astype(jnp.bfloat16)
    mod = AdaptivePaddingPallas(kernel_size=16, stride=16, dilation=1, padding="corner")
    out = jax.block_until_ready(mod(x_bf16))
    ref = _reference_pad(x_bf16, mod)
    if out.shape != (2, 4, 16, 32) or not jnp.allclose(out, ref):
        ok = False

    # Case 2: row-only padding (pad_w == 0) -> exercises the lane-dense
    # flattened path (corner) and the plane path ("same", unaligned start).
    x_rows = jax.random.normal(jax.random.PRNGKey(2), (2, 4, 14, 32), dtype=jnp.float32)
    for mode in ("corner", "same"):
        mod = AdaptivePaddingPallas(kernel_size=16, stride=16, dilation=1, padding=mode)
        out = jax.block_until_ready(mod(x_rows))
        ref = _reference_pad(x_rows, mod)
        if out.shape != (2, 4, 16, 32) or not jnp.allclose(out, ref):
            ok = False

    # Case 3: no-pad path (input already covered by the filter): returns x.
    x2 = jax.random.normal(jax.random.PRNGKey(1), (2, 4, 16, 32), dtype=jnp.float32)
    mod = AdaptivePaddingPallas(kernel_size=16, stride=16, dilation=1, padding="corner")
    out2 = jax.block_until_ready(mod(x2))
    if out2.shape != x2.shape or not jnp.allclose(out2, x2):
        ok = False

    # Case 4: directly exercise the corner-mode H-tiled path (forced small tile
    # so it compiles/runs on a small shape too).
    budget, limit = _vmem_budget_and_limit()
    x3 = x.reshape(8, 15, 17)
    out_h = jax.block_until_ready(
        _pad_planes_htiled_pallas(x3, 8, 15, 17, 16, 32, budget, limit, force_th=8))
    ref_h = jnp.pad(x3, ((0, 0), (0, 1), (0, 15)))
    if out_h.shape != (8, 16, 32) or not jnp.allclose(out_h, ref_h):
        ok = False

    print("KERNEL_OK" if ok else "KERNEL_MISMATCH")
</pallas_src>

<mosaic_0001>
module attributes {stable_mosaic.version = 11 : i64} {
  func.func @_pad_kernel_planes(%arg0: i32, %arg1: memref<8x15x17xf32, #tpu.memory_space<vmem>>, %arg2: memref<8x16x32xf32, #tpu.memory_space<vmem>>) attributes {dimension_semantics = [#tpu.dimension_semantics<parallel>], iteration_bounds = array<i64: 1>, scalar_prefetch = 0 : i64, scratch_operands = 0 : i64, tpu.core_type = #tpu.core_type<tc>, window_params = [{transform_indices = @transform_0, window_bounds = array<i64: 8, 15, 17>}, {transform_indices = @transform_1, window_bounds = array<i64: 8, 16, 32>}]} {
    %c0 = arith.constant 0 : index
    %c0_0 = arith.constant 0 : index
    %c0_1 = arith.constant 0 : index
    %0 = vector.load %arg1[%c0, %c0_0, %c0_1] : memref<8x15x17xf32, #tpu.memory_space<vmem>>, vector<8x15x17xf32>
    %cst = arith.constant 0.000000e+00 : f32
    %1 = vector.broadcast %cst : f32 to vector<8x15x15xf32>
    %2 = tpu.concatenate %0, %1 in 2 : vector<8x15x17xf32>, vector<8x15x15xf32> -> vector<8x15x32xf32>
    %c0_2 = arith.constant 0 : index
    %c0_3 = arith.constant 0 : index
    %c0_4 = arith.constant 0 : index
    %3 = vector.load %arg2[%c0_2, %c0_3, %c0_4] : memref<8x16x32xf32, #tpu.memory_space<vmem>>, vector<8x15x32xf32>
    tpu.vector_store %arg2[%c0_2, %c0_3, %c0_4], %2 {strides = array<i32>} : memref<8x16x32xf32, #tpu.memory_space<vmem>>, vector<8x15x32xf32>,
    %cst_5 = arith.constant 0.000000e+00 : f32
    %4 = vector.broadcast %cst_5 : f32 to vector<8x1x32xf32>
    %c0_6 = arith.constant 0 : index
    %c15 = arith.constant 15 : index
    %c0_7 = arith.constant 0 : index
    %5 = vector.load %arg2[%c0_6, %c15, %c0_7] : memref<8x16x32xf32, #tpu.memory_space<vmem>>, vector<8x1x32xf32>
    tpu.vector_store %arg2[%c0_6, %c15, %c0_7], %4 {strides = array<i32>} : memref<8x16x32xf32, #tpu.memory_space<vmem>>, vector<8x1x32xf32>,
    return
  }
  func.func @transform_0(%arg0: i32) -> (i32, i32, i32) {
    %c0_i32 = arith.constant 0 : i32
    %c0_i32_0 = arith.constant 0 : i32
    %c0_i32_1 = arith.constant 0 : i32
    return %arg0, %c0_i32, %c0_i32_0 : i32, i32, i32
  }
  func.func @transform_1(%arg0: i32) -> (i32, i32, i32) {
    %c0_i32 = arith.constant 0 : i32
    %c0_i32_0 = arith.constant 0 : i32
    %c0_i32_1 = arith.constant 0 : i32
    return %arg0, %c0_i32, %c0_i32_0 : i32, i32, i32
  }
}

</mosaic_0001>

<llo_original>
// kernel: _adaptive_pad.1
$region0: #{_adaptive_pad.1}
  #allocation0 [shape = 'u32[]', space=smem, size = 0x4, offset = 0x4, fixed_abs, tag = 'smem constant byte address 0x4 - core index']
  #allocation1 [shape = 'u32[144,128]{1,0:T(1,128)}', space=vmem, size = 0x12000, scoped, tag = 'internal scratch']
  %s0 = inlined_call_operand.vmem [shape: f32[8,15,17], index: 0, kind: input, shape index: {}]
  %s1 = inlined_call_operand.hbm [shape: f32[8,16,32], index: 1, kind: output, shape index: {}]
  %s2 = sld [smem:[#allocation0]]
  $region14: #{_adaptive_pad.1} parent=0
    _
  %s4 = ssub.s32 1, %s2
  %s5 = scalar_select 0, %s4, %s2
  $region1: #{_adaptive_pad.1} parent=0
    #allocation2 [shape = 'u8[65536]{0}', space=vmem, size = 0x10000, scoped, tag = 'output window, operand 0, single buffered']
    #allocation3 [shape = 's32[1]{0}', space=sflag, size = 0x4, scoped, tag = 'scoped memory for _adaptive_pad.1']
    %6 = vsyncpa [#allocation3], 0
    // Predicated region
    $region2: #{_adaptive_pad.1} parent=1 // pred_check
      _
    $region3: #{_adaptive_pad.1} parent=1 // pred_check_branch
      %8 = sbr.rel (0) target = $region5
    $region4: #{_adaptive_pad.1} parent=1 // pred_region
      _
    $region5: #{_adaptive_pad.1} parent=1 // pred_fallthru
      _
    %v9 = vld [vmem:[%s0] sm:$0xff]
    %v10 = vld [vmem:[%s0 + $0x8] sm:$0x7f]
    %v11 = vld [vmem:[%s0 + $0x10] sm:$0xff]
    %v12 = vld [vmem:[%s0 + $0x18] sm:$0x7f]
    %v13 = vld [vmem:[%s0 + $0x20] sm:$0xff]
    %v14 = vld [vmem:[%s0 + $0x28] sm:$0x7f]
    %v15 = vld [vmem:[%s0 + $0x30] sm:$0xff]
    %v16 = vld [vmem:[%s0 + $0x38] sm:$0x7f]
    %v17 = vld [vmem:[%s0 + $0x40] sm:$0xff]
    %v18 = vld [vmem:[%s0 + $0x48] sm:$0x7f]
    %v19 = vld [vmem:[%s0 + $0x50] sm:$0xff]
    %v20 = vld [vmem:[%s0 + $0x58] sm:$0x7f]
    %v21 = vld [vmem:[%s0 + $0x60] sm:$0xff]
    %v22 = vld [vmem:[%s0 + $0x68] sm:$0x7f]
    %v23 = vld [vmem:[%s0 + $0x70] sm:$0xff]
    %v24 = vld [vmem:[%s0 + $0x78] sm:$0x7f]
    %vm25 = vcmask 138240
    %v26 = vsel %vm25, %v9, 0.0
    %v27 = vsel %vm25, %v10, 0.0
    %v28 = vsel %vm25, %v11, 0.0
    %v29 = vsel %vm25, %v12, 0.0
    %v30 = vsel %vm25, %v13, 0.0
    %v31 = vsel %vm25, %v14, 0.0
    %v32 = vsel %vm25, %v15, 0.0
    %v33 = vsel %vm25, %v16, 0.0
    %v34 = vsel %vm25, %v17, 0.0
    %v35 = vsel %vm25, %v18, 0.0
    %v36 = vsel %vm25, %v19, 0.0
    %v37 = vsel %vm25, %v20, 0.0
    %v38 = vsel %vm25, %v21, 0.0
    %v39 = vsel %vm25, %v22, 0.0
    %v40 = vsel %vm25, %v23, 0.0
    %v41 = vsel %vm25, %v24, 0.0
    %vm42 = vcmask 261120
    %43 = vst.msk [vmem:[#allocation2] sm:$0xff] %vm42, %v26
    %vm44 = vcmask 260096
    %45 = vst.msk [vmem:[#allocation2 + $0x8] sm:$0x7f] %vm44, %v27
    %46 = vst.msk [vmem:[#allocation2 + $0x10] sm:$0xff] %vm42, %v28
    %47 = vst.msk [vmem:[#allocation2 + $0x18] sm:$0x7f] %vm44, %v29
    %48 = vst.msk [vmem:[#allocation2 + $0x20] sm:$0xff] %vm42, %v30
    %49 = vst.msk [vmem:[#allocation2 + $0x28] sm:$0x7f] %vm44, %v31
    %50 = vst.msk [vmem:[#allocation2 + $0x30] sm:$0xff] %vm42, %v32
    %51 = vst.msk [vmem:[#allocation2 + $0x38] sm:$0x7f] %vm44, %v33
    %52 = vst.msk [vmem:[#allocation2 + $0x40] sm:$0xff] %vm42, %v34
    %53 = vst.msk [vmem:[#allocation2 + $0x48] sm:$0x7f] %vm44, %v35
    %54 = vst.msk [vmem:[#allocation2 + $0x50] sm:$0xff] %vm42, %v36
    %55 = vst.msk [vmem:[#allocation2 + $0x58] sm:$0x7f] %vm44, %v37
    %56 = vst.msk [vmem:[#allocation2 + $0x60] sm:$0xff] %vm42, %v38
    %57 = vst.msk [vmem:[#allocation2 + $0x68] sm:$0x7f] %vm44, %v39
    %58 = vst.msk [vmem:[#allocation2 + $0x70] sm:$0xff] %vm42, %v40
    %59 = vst.msk [vmem:[#allocation2 + $0x78] sm:$0x7f] %vm44, %v41
    %vm60 = vcmask 253952
    %61 = vst.msk [vmem:[#allocation2 + $0xf] sm:$0x1] %vm60, 0.0
    %62 = vst.msk [vmem:[#allocation2 + $0x1f] sm:$0x1] %vm60, 0.0
    %63 = vst.msk [vmem:[#allocation2 + $0x2f] sm:$0x1] %vm60, 0.0
    %64 = vst.msk [vmem:[#allocation2 + $0x3f] sm:$0x1] %vm60, 0.0
    %65 = vst.msk [vmem:[#allocation2 + $0x4f] sm:$0x1] %vm60, 0.0
    %66 = vst.msk [vmem:[#allocation2 + $0x5f] sm:$0x1] %vm60, 0.0
    %67 = vst.msk [vmem:[#allocation2 + $0x6f] sm:$0x1] %vm60, 0.0
    %68 = vst.msk [vmem:[#allocation2 + $0x7f] sm:$0x1] %vm60, 0.0
    // Predicated region
    $region6: #{_adaptive_pad.1} parent=1 // pred_check
      _
    $region7: #{_adaptive_pad.1} parent=1 // pred_check_branch
      %70 = sbr.rel (0) target = $region9
    $region8: #{_adaptive_pad.1} parent=1 // pred_region
      %s72 = ssub.s32 2048, 2048
      %73 = vsyncadd [#allocation3], %s72
      %s74 = sshll.u32 [#allocation2], 4
      %s75 = int_to_ptr.vmem [resolvable:$true] %s74
      %80 = dma.vmem_to_hbm [thread:$0]  %s75, 2048, %s1, [#allocation3], 128, 128, 8
    $region9: #{_adaptive_pad.1} parent=1 // pred_fallthru
      _
    // Predicated region
    $region10: #{_adaptive_pad.1} parent=1 // pred_check
      _
    $region11: #{_adaptive_pad.1} parent=1 // pred_check_branch
      %82 = sbr.rel (0) target = $region13
    $region12: #{_adaptive_pad.1} parent=1 // pred_region
      %83 = dma.done [#allocation3], 2048
    $region13: #{_adaptive_pad.1} parent=1 // pred_fallthru
      _
    %84 = vsyncpa [#allocation3], 1

</llo_original>
